<compile_context>
chip_gen: v7x
topology: tpu7x:2x2x1
jax: 0.10.0
libtpu: 0.0.40
codegen_flags: <defaults>
</compile_context>

<pallas_src>
import numpy as np
import jax
import jax.numpy as jnp
from jax.experimental import pallas as pl
from jax.experimental.pallas import tpu as pltpu

# --- ActionDecoder hyperparameters (match the PyTorch defaults) -------------
MIN_STD = 1e-4
INIT_STD = 5.0
MEAN_SCALE = 5.0
INV_MEAN_SCALE = 1.0 / MEAN_SCALE
RAW_INIT_STD = float(np.log(np.exp(INIT_STD) - 1.0))


def _round_up(x, m):
    return ((x + m - 1) // m) * m


# --- elementwise helpers used inside the kernel ------------------------------
def _elu(x):
    # F.elu with alpha=1 (f32 on the VPU/EUP). Note elu(0) == 0, so zero
    # padding of hidden columns stays zero through the network.
    return jnp.where(x > 0, x, jnp.exp(jnp.minimum(x, 0.0)) - 1.0)


def _softplus(x):
    # numerically stable log(1 + exp(x))
    return jnp.maximum(x, 0.0) + jnp.log1p(jnp.exp(-jnp.abs(x)))


# --- fused kernel: 2 hidden Linear+ELU layers + fused output head ------------
def action_decoder_kernel(x_ref, w0_ref, b0_ref, w1_ref, b1_ref,
                          wh_ref, bh_ref, out_ref):
    size_pad = out_ref.shape[-1] // 2  # static, multiple of 128

    # Matmuls in the weights' dtype (f32 or bf16), accumulate in f32.
    x = x_ref[...].astype(w0_ref.dtype)
    h = _elu(jnp.dot(x, w0_ref[...], preferred_element_type=jnp.float32)
             + b0_ref[...])
    h = _elu(jnp.dot(h.astype(w1_ref.dtype), w1_ref[...],
                     preferred_element_type=jnp.float32)
             + b1_ref[...])

    # Single fused head matmul: [TILE_B, U] @ [U, 2*size_pad].
    head = jnp.dot(h.astype(wh_ref.dtype), wh_ref[...],
                   preferred_element_type=jnp.float32) + bh_ref[...]

    mean_raw = head[:, :size_pad]          # lane-aligned static slices
    std_raw = head[:, size_pad:]
    mean = MEAN_SCALE * jnp.tanh(mean_raw * INV_MEAN_SCALE)
    std = _softplus(std_raw + RAW_INIT_STD) + MIN_STD

    # Two 128-aligned, unmasked stores into the lane-dense output block.
    out_ref[:, :size_pad] = mean
    out_ref[:, size_pad:] = std


def action_decoder(features, params, *, tile_b=256, compute_dtype=jnp.float32):
    """features: [B, F] float32 -> (mean [B, size], std [B, size])."""
    B, F = features.shape
    U = params["w0"].shape[1]
    size = params["w_mean"].shape[1]
    # Each head half lane-padded so the output block is a 128-lane multiple.
    size_pad = max(128, _round_up(size, 128))

    # --- fuse + lane-pad the output head: [U, 2*size_pad], [1, 2*size_pad] ---
    wh = jnp.zeros((U, 2 * size_pad), jnp.float32)
    wh = wh.at[:, :size].set(params["w_mean"])
    wh = wh.at[:, size_pad:size_pad + size].set(params["w_std"])
    bh = jnp.zeros((1, 2 * size_pad), jnp.float32)
    bh = bh.at[:, :size].set(params["b_mean"])
    bh = bh.at[:, size_pad:size_pad + size].set(params["b_std"])

    # Weights in compute dtype (bf16 halves matmul-operand bytes on v6e/v7x);
    # biases stay f32 (added to the f32 accumulator).
    w0 = params["w0"].astype(compute_dtype)
    w1 = params["w1"].astype(compute_dtype)
    wh = wh.astype(compute_dtype)
    b0, b1 = params["b0"], params["b1"]

    # --- batch tiling: pad B to a multiple of the batch tile ------------------
    tile_b = int(max(8, min(tile_b, _round_up(B, 8))))
    B_pad = _round_up(B, tile_b)
    x = features
    if B_pad != B:
        x = jnp.pad(x, ((0, B_pad - B), (0, 0)))
    n_tiles = B_pad // tile_b

    out_bytes = B_pad * 2 * size_pad * 4
    in_bytes = sum(int(a.size) * a.dtype.itemsize
                   for a in (x, w0, b0, w1, b1, wh, bh))
    cost = pl.CostEstimate(
        flops=2 * B_pad * (F * U + U * U + U * 2 * size_pad),
        transcendentals=B_pad * (2 * U + 2 * size_pad),
        bytes_accessed=in_bytes + out_bytes,
    )

    out = pl.pallas_call(
        action_decoder_kernel,
        out_shape=jax.ShapeDtypeStruct((B_pad, 2 * size_pad), jnp.float32),
        grid=(n_tiles,),
        in_specs=[
            pl.BlockSpec((tile_b, F), lambda i: (i, 0)),        # features tile
            pl.BlockSpec((F, U), lambda i: (0, 0)),             # w0 (resident)
            pl.BlockSpec((1, U), lambda i: (0, 0)),             # b0
            pl.BlockSpec((U, U), lambda i: (0, 0)),             # w1
            pl.BlockSpec((1, U), lambda i: (0, 0)),             # b1
            pl.BlockSpec((U, 2 * size_pad), lambda i: (0, 0)),  # fused head W
            pl.BlockSpec((1, 2 * size_pad), lambda i: (0, 0)),  # fused head b
        ],
        out_specs=pl.BlockSpec((tile_b, 2 * size_pad), lambda i: (i, 0)),
        compiler_params=pltpu.CompilerParams(
            # "parallel" lets v7x shard batch tiles across both TensorCores;
            # harmless on v5e/v6e. Tiles here are tiny (<1 MiB), so no
            # vmem_limit_bytes override is needed even on v7x's 64 MiB VMEM.
            dimension_semantics=("parallel",),
        ),
        cost_estimate=cost,
    )(x, w0, b0, w1, b1, wh, bh)

    mean = out[:B, :size]
    std = out[:B, size_pad:size_pad + size]
    return mean, std


# --- pure-JAX reference (for a sanity check) ---------------------------------
def action_decoder_ref(features, params):
    h = jax.nn.elu(features @ params["w0"] + params["b0"])
    h = jax.nn.elu(h @ params["w1"] + params["b1"])
    mean_raw = h @ params["w_mean"] + params["b_mean"]
    std_raw = h @ params["w_std"] + params["b_std"]
    mean = MEAN_SCALE * jnp.tanh(mean_raw / MEAN_SCALE)
    std = jax.nn.softplus(std_raw + RAW_INIT_STD) + MIN_STD
    return mean, std


def make_params(key, feat_dim, units, size):
    ks = jax.random.split(key, 8)
    scale0 = 1.0 / np.sqrt(feat_dim)
    scale1 = 1.0 / np.sqrt(units)
    return {
        "w0": jax.random.uniform(ks[0], (feat_dim, units), jnp.float32, -scale0, scale0),
        "b0": jax.random.uniform(ks[1], (1, units), jnp.float32, -scale0, scale0),
        "w1": jax.random.uniform(ks[2], (units, units), jnp.float32, -scale1, scale1),
        "b1": jax.random.uniform(ks[3], (1, units), jnp.float32, -scale1, scale1),
        "w_mean": jax.random.uniform(ks[4], (units, size), jnp.float32, -scale1, scale1),
        "b_mean": jax.random.uniform(ks[5], (1, size), jnp.float32, -scale1, scale1),
        "w_std": jax.random.uniform(ks[6], (units, size), jnp.float32, -scale1, scale1),
        "b_std": jax.random.uniform(ks[7], (1, size), jnp.float32, -scale1, scale1),
    }


if __name__ == "__main__":
    # Small shapes consistent with the module: ActionDecoder(size=4,
    # num_layers=2, units=32) applied to features of dim 32, batch 8.
    B, FEAT, UNITS, SIZE = 8, 32, 32, 4

    key = jax.random.PRNGKey(0)
    kx, kp = jax.random.split(key)
    features = jax.random.normal(kx, (B, FEAT), jnp.float32)
    params = make_params(kp, FEAT, UNITS, SIZE)

    mean_ref, std_ref = action_decoder_ref(features, params)

    # f32 compute path: matches the reference.
    mean, std = action_decoder(features, params, compute_dtype=jnp.float32)
    jax.block_until_ready((mean, std))
    np.testing.assert_allclose(np.asarray(mean), np.asarray(mean_ref), rtol=1e-4, atol=1e-4)
    np.testing.assert_allclose(np.asarray(std), np.asarray(std_ref), rtol=1e-4, atol=1e-4)

    # bf16 matmul operands (v6e/v7x-friendly path): loose tolerance.
    mean_bf, std_bf = action_decoder(features, params, compute_dtype=jnp.bfloat16)
    jax.block_until_ready((mean_bf, std_bf))
    np.testing.assert_allclose(np.asarray(mean_bf), np.asarray(mean_ref), rtol=1e-1, atol=1e-1)
    np.testing.assert_allclose(np.asarray(std_bf), np.asarray(std_ref), rtol=1e-1, atol=1e-1)

    print("KERNEL_OK")
</pallas_src>

<mosaic_0001>
module attributes {stable_mosaic.version = 11 : i64} {
  func.func @action_decoder_kernel(%arg0: i32, %arg1: memref<8x32xf32, #tpu.memory_space<vmem>>, %arg2: memref<32x32xf32, #tpu.memory_space<vmem>>, %arg3: memref<1x32xf32, #tpu.memory_space<vmem>>, %arg4: memref<32x32xf32, #tpu.memory_space<vmem>>, %arg5: memref<1x32xf32, #tpu.memory_space<vmem>>, %arg6: memref<32x256xf32, #tpu.memory_space<vmem>>, %arg7: memref<1x256xf32, #tpu.memory_space<vmem>>, %arg8: memref<8x256xf32, #tpu.memory_space<vmem>>) attributes {dimension_semantics = [#tpu.dimension_semantics<parallel>], iteration_bounds = array<i64: 1>, scalar_prefetch = 0 : i64, scratch_operands = 0 : i64, tpu.core_type = #tpu.core_type<tc>, window_params = [{transform_indices = @transform_0, window_bounds = array<i64: 8, 32>}, {pipeline_mode = #tpu.pipeline_mode<synchronous>, transform_indices = @transform_1, window_bounds = array<i64: 32, 32>}, {pipeline_mode = #tpu.pipeline_mode<synchronous>, transform_indices = @transform_2, window_bounds = array<i64: 1, 32>}, {pipeline_mode = #tpu.pipeline_mode<synchronous>, transform_indices = @transform_3, window_bounds = array<i64: 32, 32>}, {pipeline_mode = #tpu.pipeline_mode<synchronous>, transform_indices = @transform_4, window_bounds = array<i64: 1, 32>}, {pipeline_mode = #tpu.pipeline_mode<synchronous>, transform_indices = @transform_5, window_bounds = array<i64: 32, 256>}, {pipeline_mode = #tpu.pipeline_mode<synchronous>, transform_indices = @transform_6, window_bounds = array<i64: 1, 256>}, {transform_indices = @transform_7, window_bounds = array<i64: 8, 256>}]} {
    %c0 = arith.constant 0 : index
    %c0_0 = arith.constant 0 : index
    %0 = vector.load %arg1[%c0, %c0_0] : memref<8x32xf32, #tpu.memory_space<vmem>>, vector<8x32xf32>
    %c0_1 = arith.constant 0 : index
    %c0_2 = arith.constant 0 : index
    %1 = vector.load %arg2[%c0_1, %c0_2] : memref<32x32xf32, #tpu.memory_space<vmem>>, vector<32x32xf32>
    %cst = arith.constant dense<0.000000e+00> : vector<8x32xf32>
    %2 = tpu.matmul %0, %1, %cst {dimension_numbers = #tpu.dot_dimension_numbers<[1], [0], [0], [1], [0, 0, 1, 1], [], []>} : vector<8x32xf32>, vector<32x32xf32>, vector<8x32xf32> -> vector<8x32xf32>
    %c0_3 = arith.constant 0 : index
    %c0_4 = arith.constant 0 : index
    %3 = vector.load %arg3[%c0_3, %c0_4] : memref<1x32xf32, #tpu.memory_space<vmem>>, vector<1x32xf32>
    %4 = vector.broadcast %3 : vector<1x32xf32> to vector<8x32xf32>
    %5 = arith.addf %2, %4 : vector<8x32xf32>
    %cst_5 = arith.constant 0.000000e+00 : f32
    %6 = vector.broadcast %cst_5 : f32 to vector<8x32xf32>
    %7 = arith.cmpf ogt, %5, %6 : vector<8x32xf32>
    %cst_6 = arith.constant 0.000000e+00 : f32
    %8 = vector.broadcast %cst_6 : f32 to vector<8x32xf32>
    %9 = arith.minimumf %5, %8 : vector<8x32xf32>
    %10 = math.exp %9 : vector<8x32xf32>
    %cst_7 = arith.constant 1.000000e+00 : f32
    %11 = vector.broadcast %cst_7 : f32 to vector<8x32xf32>
    %12 = arith.subf %10, %11 : vector<8x32xf32>
    %13 = arith.select %7, %5, %12 : vector<8x32xi1>, vector<8x32xf32>
    %c0_8 = arith.constant 0 : index
    %c0_9 = arith.constant 0 : index
    %14 = vector.load %arg4[%c0_8, %c0_9] : memref<32x32xf32, #tpu.memory_space<vmem>>, vector<32x32xf32>
    %cst_10 = arith.constant dense<0.000000e+00> : vector<8x32xf32>
    %15 = tpu.matmul %13, %14, %cst_10 {dimension_numbers = #tpu.dot_dimension_numbers<[1], [0], [0], [1], [0, 0, 1, 1], [], []>} : vector<8x32xf32>, vector<32x32xf32>, vector<8x32xf32> -> vector<8x32xf32>
    %c0_11 = arith.constant 0 : index
    %c0_12 = arith.constant 0 : index
    %16 = vector.load %arg5[%c0_11, %c0_12] : memref<1x32xf32, #tpu.memory_space<vmem>>, vector<1x32xf32>
    %17 = vector.broadcast %16 : vector<1x32xf32> to vector<8x32xf32>
    %18 = arith.addf %15, %17 : vector<8x32xf32>
    %cst_13 = arith.constant 0.000000e+00 : f32
    %19 = vector.broadcast %cst_13 : f32 to vector<8x32xf32>
    %20 = arith.cmpf ogt, %18, %19 : vector<8x32xf32>
    %cst_14 = arith.constant 0.000000e+00 : f32
    %21 = vector.broadcast %cst_14 : f32 to vector<8x32xf32>
    %22 = arith.minimumf %18, %21 : vector<8x32xf32>
    %23 = math.exp %22 : vector<8x32xf32>
    %cst_15 = arith.constant 1.000000e+00 : f32
    %24 = vector.broadcast %cst_15 : f32 to vector<8x32xf32>
    %25 = arith.subf %23, %24 : vector<8x32xf32>
    %26 = arith.select %20, %18, %25 : vector<8x32xi1>, vector<8x32xf32>
    %c0_16 = arith.constant 0 : index
    %c0_17 = arith.constant 0 : index
    %27 = vector.load %arg6[%c0_16, %c0_17] : memref<32x256xf32, #tpu.memory_space<vmem>>, vector<32x256xf32>
    %cst_18 = arith.constant dense<0.000000e+00> : vector<8x256xf32>
    %28 = tpu.matmul %26, %27, %cst_18 {dimension_numbers = #tpu.dot_dimension_numbers<[1], [0], [0], [1], [0, 0, 1, 1], [], []>} : vector<8x32xf32>, vector<32x256xf32>, vector<8x256xf32> -> vector<8x256xf32>
    %c0_19 = arith.constant 0 : index
    %c0_20 = arith.constant 0 : index
    %29 = vector.load %arg7[%c0_19, %c0_20] : memref<1x256xf32, #tpu.memory_space<vmem>>, vector<1x256xf32>
    %30 = vector.broadcast %29 : vector<1x256xf32> to vector<8x256xf32>
    %31 = arith.addf %28, %30 : vector<8x256xf32>
    %32 = vector.extract_strided_slice %31 {offsets = [0, 0], sizes = [8, 128], strides = [1, 1]} : vector<8x256xf32> to vector<8x128xf32>
    %33 = vector.extract_strided_slice %31 {offsets = [0, 128], sizes = [8, 128], strides = [1, 1]} : vector<8x256xf32> to vector<8x128xf32>
    %cst_21 = arith.constant 2.000000e-01 : f32
    %34 = vector.broadcast %cst_21 : f32 to vector<8x128xf32>
    %35 = arith.mulf %32, %34 : vector<8x128xf32>
    %36 = math.tanh %35 : vector<8x128xf32>
    %cst_22 = arith.constant 5.000000e+00 : f32
    %37 = vector.broadcast %cst_22 : f32 to vector<8x128xf32>
    %38 = arith.mulf %37, %36 : vector<8x128xf32>
    %cst_23 = arith.constant 4.9932394 : f32
    %39 = vector.broadcast %cst_23 : f32 to vector<8x128xf32>
    %40 = arith.addf %33, %39 : vector<8x128xf32>
    %cst_24 = arith.constant 0.000000e+00 : f32
    %41 = vector.broadcast %cst_24 : f32 to vector<8x128xf32>
    %42 = arith.maximumf %40, %41 : vector<8x128xf32>
    %43 = math.absf %40 : vector<8x128xf32>
    %cst_25 = arith.constant 0.000000e+00 : f32
    %44 = vector.broadcast %cst_25 : f32 to vector<8x128xf32>
    %45 = arith.subf %44, %43 : vector<8x128xf32>
    %46 = math.exp %45 : vector<8x128xf32>
    %47 = math.log1p %46 : vector<8x128xf32>
    %48 = arith.addf %42, %47 : vector<8x128xf32>
    %cst_26 = arith.constant 9.99999974E-5 : f32
    %49 = vector.broadcast %cst_26 : f32 to vector<8x128xf32>
    %50 = arith.addf %48, %49 : vector<8x128xf32>
    %c0_27 = arith.constant 0 : index
    %c0_28 = arith.constant 0 : index
    %51 = vector.load %arg8[%c0_27, %c0_28] : memref<8x256xf32, #tpu.memory_space<vmem>>, vector<8x128xf32>
    tpu.vector_store %arg8[%c0_27, %c0_28], %38 {strides = array<i32>} : memref<8x256xf32, #tpu.memory_space<vmem>>, vector<8x128xf32>,
    %c0_29 = arith.constant 0 : index
    %c128 = arith.constant 128 : index
    %52 = vector.load %arg8[%c0_29, %c128] : memref<8x256xf32, #tpu.memory_space<vmem>>, vector<8x128xf32>
    tpu.vector_store %arg8[%c0_29, %c128], %50 {strides = array<i32>} : memref<8x256xf32, #tpu.memory_space<vmem>>, vector<8x128xf32>,
    return
  }
  func.func @transform_0(%arg0: i32) -> (i32, i32) {
    %c0_i32 = arith.constant 0 : i32
    %c0_i32_0 = arith.constant 0 : i32
    return %arg0, %c0_i32 : i32, i32
  }
  func.func @transform_1(%arg0: i32) -> (i32, i32) {
    %c0_i32 = arith.constant 0 : i32
    %c0_i32_0 = arith.constant 0 : i32
    %c0_i32_1 = arith.constant 0 : i32
    return %c0_i32, %c0_i32_0 : i32, i32
  }
  func.func @transform_2(%arg0: i32) -> (i32, i32) {
    %c0_i32 = arith.constant 0 : i32
    %c0_i32_0 = arith.constant 0 : i32
    %c0_i32_1 = arith.constant 0 : i32
    return %c0_i32, %c0_i32_0 : i32, i32
  }
  func.func @transform_3(%arg0: i32) -> (i32, i32) {
    %c0_i32 = arith.constant 0 : i32
    %c0_i32_0 = arith.constant 0 : i32
    %c0_i32_1 = arith.constant 0 : i32
    return %c0_i32, %c0_i32_0 : i32, i32
  }
  func.func @transform_4(%arg0: i32) -> (i32, i32) {
    %c0_i32 = arith.constant 0 : i32
    %c0_i32_0 = arith.constant 0 : i32
    %c0_i32_1 = arith.constant 0 : i32
    return %c0_i32, %c0_i32_0 : i32, i32
  }
  func.func @transform_5(%arg0: i32) -> (i32, i32) {
    %c0_i32 = arith.constant 0 : i32
    %c0_i32_0 = arith.constant 0 : i32
    %c0_i32_1 = arith.constant 0 : i32
    return %c0_i32, %c0_i32_0 : i32, i32
  }
  func.func @transform_6(%arg0: i32) -> (i32, i32) {
    %c0_i32 = arith.constant 0 : i32
    %c0_i32_0 = arith.constant 0 : i32
    %c0_i32_1 = arith.constant 0 : i32
    return %c0_i32, %c0_i32_0 : i32, i32
  }
  func.func @transform_7(%arg0: i32) -> (i32, i32) {
    %c0_i32 = arith.constant 0 : i32
    %c0_i32_0 = arith.constant 0 : i32
    return %arg0, %c0_i32 : i32, i32
  }
}

</mosaic_0001>

<llo_original>
// kernel: tpu_custom_call.1
$region0: #{tpu_custom_call.1}
  #allocation0 [shape = 'u32[]', space=smem, size = 0x4, offset = 0x4, fixed_abs, tag = 'smem constant byte address 0x4 - core index']
  #allocation1 [shape = 'u32[144,128]{1,0:T(1,128)}', space=vmem, size = 0x12000, scoped, tag = 'internal scratch']
  %s0 = inlined_call_operand.hbm [shape: f32[8,32], index: 0, kind: input, shape index: {}]
  %s1 = inlined_call_operand.hbm [shape: f32[32,32], index: 1, kind: input, shape index: {}]
  %s2 = inlined_call_operand.vmem [shape: f32[1,32], index: 2, kind: input, shape index: {}]
  %s3 = inlined_call_operand.hbm [shape: f32[32,32], index: 3, kind: input, shape index: {}]
  %s4 = inlined_call_operand.vmem [shape: f32[1,32], index: 4, kind: input, shape index: {}]
  %s5 = inlined_call_operand.hbm [shape: f32[32,256], index: 5, kind: input, shape index: {}]
  %s6 = inlined_call_operand.vmem [shape: f32[1,256], index: 6, kind: input, shape index: {}]
  %s7 = inlined_call_operand.hbm [shape: f32[8,256], index: 7, kind: output, shape index: {}]
  %s8 = sld [smem:[#allocation0]]
  $region54: #{tpu_custom_call.1} parent=0
    _
  %s10 = ssub.s32 1, %s8
  %s11 = scalar_select 0, %s10, %s8
  $region1: #{tpu_custom_call.1} parent=0
    #allocation2 [shape = 'u8[4096]{0}', space=vmem, size = 0x1000, scoped, tag = 'input window, operand 0, single buffered']
    #allocation3 [shape = 's32[1]{0}', space=sflag, size = 0x4, scoped, tag = 'scoped memory for tpu_custom_call.1']
    #allocation4 [shape = 's32[1]{0}', space=sflag, size = 0x4, scoped, tag = 'scoped memory for tpu_custom_call.1']
    #allocation5 [shape = 'u8[16384]{0}', space=vmem, size = 0x4000, scoped, tag = 'input window, operand 1, single buffered']
    #allocation6 [shape = 's32[1]{0}', space=sflag, size = 0x4, scoped, tag = 'scoped memory for tpu_custom_call.1']
    #allocation7 [shape = 'u8[16384]{0}', space=vmem, size = 0x4000, scoped, tag = 'input window, operand 3, single buffered']
    #allocation8 [shape = 'u8[32768]{0}', space=vmem, size = 0x8000, scoped, tag = 'input window, operand 5, single buffered']
    #allocation9 [shape = 's32[1]{0}', space=sflag, size = 0x4, scoped, tag = 'scoped memory for tpu_custom_call.1']
    #allocation10 [shape = 'u8[8192]{0}', space=vmem, size = 0x2000, scoped, tag = 'output window, operand 0, single buffered']
    %12 = vsyncpa [#allocation3], 0
    %13 = vsyncpa [#allocation6], 0
    %14 = vsyncpa [#allocation9], 0
    %15 = vsyncpa [#allocation4], 0
    // Predicated region
    $region2: #{tpu_custom_call.1} parent=1 // pred_check
      _
    $region3: #{tpu_custom_call.1} parent=1 // pred_check_branch
      %17 = sbr.rel (0) target = $region5
    $region4: #{tpu_custom_call.1} parent=1 // pred_region
      %s19 = ssub.s32 128, 128
      %20 = vsyncadd [#allocation3], %s19
      %s22 = sshll.u32 [#allocation2], 4
      %s23 = int_to_ptr.vmem [resolvable:$true] %s22
      %25 = dma.hbm_to_vmem [thread:$0]  %s0, 128, %s23, [#allocation3]
    $region5: #{tpu_custom_call.1} parent=1 // pred_fallthru
      _
    // Predicated region
    $region6: #{tpu_custom_call.1} parent=1 // pred_check
      _
    $region7: #{tpu_custom_call.1} parent=1 // pred_check_branch
      %27 = sbr.rel (0) target = $region9
    $region8: #{tpu_custom_call.1} parent=1 // pred_region
      %s29 = ssub.s32 512, 512
      %30 = vsyncadd [#allocation6], %s29
      %s31 = sshll.u32 [#allocation5], 4
      %s32 = int_to_ptr.vmem [resolvable:$true] %s31
      %37 = dma.hbm_to_vmem [thread:$0]  %s1, 512, %s32, [#allocation6], 128, 128, 8
    $region9: #{tpu_custom_call.1} parent=1 // pred_fallthru
      _
    // Predicated region
    $region10: #{tpu_custom_call.1} parent=1 // pred_check
      _
    $region11: #{tpu_custom_call.1} parent=1 // pred_check_branch
      %39 = sbr.rel (0) target = $region13
    $region12: #{tpu_custom_call.1} parent=1 // pred_region
      _
    $region13: #{tpu_custom_call.1} parent=1 // pred_fallthru
      _
    // Predicated region
    $region14: #{tpu_custom_call.1} parent=1 // pred_check
      _
    $region15: #{tpu_custom_call.1} parent=1 // pred_check_branch
      %41 = sbr.rel (0) target = $region17
    $region16: #{tpu_custom_call.1} parent=1 // pred_region
      %s43 = ssub.s32 512, 512
      %44 = vsyncadd [#allocation6], %s43
      %s45 = sshll.u32 [#allocation7], 4
      %s46 = int_to_ptr.vmem [resolvable:$true] %s45
      %51 = dma.hbm_to_vmem [thread:$0]  %s3, 512, %s46, [#allocation6], 128, 128, 8
    $region17: #{tpu_custom_call.1} parent=1 // pred_fallthru
      _
    // Predicated region
    $region18: #{tpu_custom_call.1} parent=1 // pred_check
      _
    $region19: #{tpu_custom_call.1} parent=1 // pred_check_branch
      %53 = sbr.rel (0) target = $region21
    $region20: #{tpu_custom_call.1} parent=1 // pred_region
      _
    $region21: #{tpu_custom_call.1} parent=1 // pred_fallthru
      _
    // Predicated region
    $region22: #{tpu_custom_call.1} parent=1 // pred_check
      _
    $region23: #{tpu_custom_call.1} parent=1 // pred_check_branch
      %55 = sbr.rel (0) target = $region25
    $region24: #{tpu_custom_call.1} parent=1 // pred_region
      %s57 = ssub.s32 1024, 1024
      %58 = vsyncadd [#allocation9], %s57
      %s59 = sshll.u32 [#allocation8], 4
      %s60 = int_to_ptr.vmem [resolvable:$true] %s59
      %65 = dma.hbm_to_vmem [thread:$0]  %s5, 1024, %s60, [#allocation9], 256, 256, 16
    $region25: #{tpu_custom_call.1} parent=1 // pred_fallthru
      _
    // Predicated region
    $region26: #{tpu_custom_call.1} parent=1 // pred_check
      _
    $region27: #{tpu_custom_call.1} parent=1 // pred_check_branch
      %67 = sbr.rel (0) target = $region29
    $region28: #{tpu_custom_call.1} parent=1 // pred_region
      _
    $region29: #{tpu_custom_call.1} parent=1 // pred_fallthru
      _
    // Predicated region
    $region30: #{tpu_custom_call.1} parent=1 // pred_check
      _
    $region31: #{tpu_custom_call.1} parent=1 // pred_check_branch
      %69 = sbr.rel (0) target = $region33
    $region32: #{tpu_custom_call.1} parent=1 // pred_region
      %70 = dma.done [#allocation3], 128
    $region33: #{tpu_custom_call.1} parent=1 // pred_fallthru
      _
    // Predicated region
    $region34: #{tpu_custom_call.1} parent=1 // pred_check
      _
    $region35: #{tpu_custom_call.1} parent=1 // pred_check_branch
      %72 = sbr.rel (0) target = $region37
    $region36: #{tpu_custom_call.1} parent=1 // pred_region
      %73 = dma.done [#allocation6], 512
    $region37: #{tpu_custom_call.1} parent=1 // pred_fallthru
      _
    // Predicated region
    $region38: #{tpu_custom_call.1} parent=1 // pred_check
      _
    $region39: #{tpu_custom_call.1} parent=1 // pred_check_branch
      %75 = sbr.rel (0) target = $region41
    $region40: #{tpu_custom_call.1} parent=1 // pred_region
      %76 = dma.done [#allocation6], 512
    $region41: #{tpu_custom_call.1} parent=1 // pred_fallthru
      _
    // Predicated region
    $region42: #{tpu_custom_call.1} parent=1 // pred_check
      _
    $region43: #{tpu_custom_call.1} parent=1 // pred_check_branch
      %78 = sbr.rel (0) target = $region45
    $region44: #{tpu_custom_call.1} parent=1 // pred_region
      %79 = dma.done [#allocation9], 1024
    $region45: #{tpu_custom_call.1} parent=1 // pred_fallthru
      _
    %v80 = vld [vmem:[#allocation2] sm:$0xff]
    %v81 = vld [vmem:[#allocation5] sm:$0xff]
    %v82 = vld [vmem:[#allocation5 + $0x8] sm:$0xff]
    %v83 = vld [vmem:[#allocation5 + $0x10] sm:$0xff]
    %v84 = vld [vmem:[#allocation5 + $0x18] sm:$0xff]
    %v85 = vld [vmem:[%s2] sm:$0x1]
    %v87 = vlaneseq
    %v88 = vshrl.u32 %v87, 7
    %v89 = vsub.s32 0, %v88
    %v90 = vrot.slane %v85, %v89
    %vm92 = vcmask 261120
    %v94 = vsel %vm92, %v80, 0
    %96 = vmatprep.subr.mxu0 0.0
    %97 = vmatpush1.msra.mxu0 %v81
    %98 = vmatprep.subr.mxu0 0.0
    %99 = vmatpush1.msra.mxu0 %v82
    %100 = vmatprep.subr.mxu0 0.0
    %101 = vmatpush1.msra.mxu0 %v83
    %102 = vmatprep.subr.mxu0 0.0
    %103 = vmatpush1.msra.mxu0 %v84
    %104 = vmatprep.subr.mxu0 0.0
    %105 = vmatpush1.msra.mxu0 0.0
    %106 = vmatprep.subr.mxu0 0.0
    %107 = vmatpush1.msra.mxu0 0.0
    %108 = vmatprep.subr.mxu0 0.0
    %109 = vmatpush1.msra.mxu0 0.0
    %110 = vmatprep.subr.mxu0 0.0
    %111 = vmatpush1.msra.mxu0 0.0
    %112 = vmatprep.subr.mxu0 0.0
    %113 = vmatpush1.msra.mxu0 0.0
    %114 = vmatprep.subr.mxu0 0.0
    %115 = vmatpush1.msra.mxu0 0.0
    %116 = vmatprep.subr.mxu0 0.0
    %117 = vmatpush1.msra.mxu0 0.0
    %118 = vmatprep.subr.mxu0 0.0
    %119 = vmatpush1.msra.mxu0 0.0
    %120 = vmatprep.subr.mxu0 0.0
    %121 = vmatpush1.msra.mxu0 0.0
    %122 = vmatprep.subr.mxu0 0.0
    %123 = vmatpush1.msra.mxu0 0.0
    %124 = vmatprep.subr.mxu0 0.0
    %125 = vmatpush1.msra.mxu0 0.0
    %126 = vmatprep.subr.mxu0 0.0
    %127 = vmatpush1.msra.mxu0 0.0
    %128 = vmatprep.subr.mxu0 0.0
    %129 = vmatpush1.msra.mxu0 0.0
    %130 = vmatprep.subr.mxu0 0.0
    %131 = vmatpush1.msra.mxu0 0.0
    %132 = vmatprep.subr.mxu0 0.0
    %133 = vmatpush1.msra.mxu0 0.0
    %134 = vmatprep.subr.mxu0 0.0
    %135 = vmatpush1.msra.mxu0 0.0
    %136 = vmatprep.subr.mxu0 0.0
    %137 = vmatpush1.msra.mxu0 0.0
    %138 = vmatprep.subr.mxu0 0.0
    %139 = vmatpush1.msra.mxu0 0.0
    %140 = vmatprep.subr.mxu0 0.0
    %141 = vmatpush1.msra.mxu0 0.0
    %142 = vmatprep.subr.mxu0 0.0
    %143 = vmatpush1.msra.mxu0 0.0
    %144 = vmatprep.subr.mxu0 0.0
    %145 = vmatpush1.msra.mxu0 0.0
    %146 = vmatprep.subr.mxu0 0.0
    %147 = vmatpush1.msra.mxu0 0.0
    %148 = vmatprep.subr.mxu0 0.0
    %149 = vmatpush1.msra.mxu0 0.0
    %150 = vmatprep.subr.mxu0 0.0
    %151 = vmatpush1.msra.mxu0 0.0
    %152 = vmatprep.subr.mxu0 0.0
    %153 = vmatpush1.msra.mxu0 0.0
    %154 = vmatprep.subr.mxu0 0.0
    %155 = vmatpush1.msra.mxu0 0.0
    %156 = vmatprep.subr.mxu0 0.0
    %157 = vmatpush1.msra.mxu0 0.0
    %158 = vmatprep.subr.mxu0 0.0
    %159 = vmatpush1.msra.mxu0 0.0
    %160 = vmatprep.mubr.f32.mxu0 0.0
    %161 = vmatmul.mubr.f32.gmra.mrb[0].mxu0 %v94
    %v162 = vpop.f32.mrb[0].mxu0
    %v163 = vadd.f32 %v90, %v162
    %v164 = vpop.f32.mrb[0].mxu0
    %165 = vdwg.mxu0
    %vm166 = vcmp.gt.f32.partialorder %v163, 0.0
    %v167 = vmin.f32 %v163, 0.0
    %v168 = vmul.f32 %v167, 1.442695
    %v169 = vpow.pop %v168
    %v170 = vsub.f32 %v169, 1.0
    %v171 = vsel %vm166, %v163, %v170
    %v172 = vld [vmem:[#allocation7] sm:$0xff]
    %v173 = vld [vmem:[#allocation7 + $0x8] sm:$0xff]
    %v174 = vld [vmem:[#allocation7 + $0x10] sm:$0xff]
    %v175 = vld [vmem:[#allocation7 + $0x18] sm:$0xff]
    %v176 = vld [vmem:[%s4] sm:$0x1]
    %v178 = vlaneseq
    %v179 = vshrl.u32 %v178, 7
    %v180 = vsub.s32 0, %v179
    %v181 = vrot.slane %v176, %v180
    %v184 = vsel %vm92, %v171, 0
    %186 = vmatprep.subr.mxu0 0.0
    %187 = vmatpush1.msra.mxu0 %v172
    %188 = vmatprep.subr.mxu0 0.0
    %189 = vmatpush1.msra.mxu0 %v173
    %190 = vmatprep.subr.mxu0 0.0
    %191 = vmatpush1.msra.mxu0 %v174
    %192 = vmatprep.subr.mxu0 0.0
    %193 = vmatpush1.msra.mxu0 %v175
    %194 = vmatprep.subr.mxu0 0.0
    %195 = vmatpush1.msra.mxu0 0.0
    %196 = vmatprep.subr.mxu0 0.0
    %197 = vmatpush1.msra.mxu0 0.0
    %198 = vmatprep.subr.mxu0 0.0
    %199 = vmatpush1.msra.mxu0 0.0
    %200 = vmatprep.subr.mxu0 0.0
    %201 = vmatpush1.msra.mxu0 0.0
    %202 = vmatprep.subr.mxu0 0.0
    %203 = vmatpush1.msra.mxu0 0.0
    %204 = vmatprep.subr.mxu0 0.0
    %205 = vmatpush1.msra.mxu0 0.0
    %206 = vmatprep.subr.mxu0 0.0
    %207 = vmatpush1.msra.mxu0 0.0
    %208 = vmatprep.subr.mxu0 0.0
    %209 = vmatpush1.msra.mxu0 0.0
    %210 = vmatprep.subr.mxu0 0.0
    %211 = vmatpush1.msra.mxu0 0.0
    %212 = vmatprep.subr.mxu0 0.0
    %213 = vmatpush1.msra.mxu0 0.0
    %214 = vmatprep.subr.mxu0 0.0
    %215 = vmatpush1.msra.mxu0 0.0
    %216 = vmatprep.subr.mxu0 0.0
    %217 = vmatpush1.msra.mxu0 0.0
    %218 = vmatprep.subr.mxu0 0.0
    %219 = vmatpush1.msra.mxu0 0.0
    %220 = vmatprep.subr.mxu0 0.0
    %221 = vmatpush1.msra.mxu0 0.0
    %222 = vmatprep.subr.mxu0 0.0
    %223 = vmatpush1.msra.mxu0 0.0
    %224 = vmatprep.subr.mxu0 0.0
    %225 = vmatpush1.msra.mxu0 0.0
    %226 = vmatprep.subr.mxu0 0.0
    %227 = vmatpush1.msra.mxu0 0.0
    %228 = vmatprep.subr.mxu0 0.0
    %229 = vmatpush1.msra.mxu0 0.0
    %230 = vmatprep.subr.mxu0 0.0
    %231 = vmatpush1.msra.mxu0 0.0
    %232 = vmatprep.subr.mxu0 0.0
    %233 = vmatpush1.msra.mxu0 0.0
    %234 = vmatprep.subr.mxu0 0.0
    %235 = vmatpush1.msra.mxu0 0.0
    %236 = vmatprep.subr.mxu0 0.0
    %237 = vmatpush1.msra.mxu0 0.0
    %238 = vmatprep.subr.mxu0 0.0
    %239 = vmatpush1.msra.mxu0 0.0
    %240 = vmatprep.subr.mxu0 0.0
    %241 = vmatpush1.msra.mxu0 0.0
    %242 = vmatprep.subr.mxu0 0.0
    %243 = vmatpush1.msra.mxu0 0.0
    %244 = vmatprep.subr.mxu0 0.0
    %245 = vmatpush1.msra.mxu0 0.0
    %246 = vmatprep.subr.mxu0 0.0
    %247 = vmatpush1.msra.mxu0 0.0
    %248 = vmatprep.subr.mxu0 0.0
    %249 = vmatpush1.msra.mxu0 0.0
    %250 = vmatprep.mubr.f32.mxu0 0.0
    %251 = vmatmul.mubr.f32.gmra.mrb[0].mxu0 %v184
    %v252 = vpop.f32.mrb[0].mxu0
    %v253 = vadd.f32 %v181, %v252
    %v254 = vpop.f32.mrb[0].mxu0
    %255 = vdwg.mxu0
    %vm256 = vcmp.gt.f32.partialorder %v253, 0.0
    %v257 = vmin.f32 %v253, 0.0
    %v258 = vmul.f32 %v257, 1.442695
    %v259 = vpow.pop %v258
    %v260 = vsub.f32 %v259, 1.0
    %v261 = vsel %vm256, %v253, %v260
    %v262 = vld [vmem:[#allocation8] sm:$0xff]
    %v263 = vld [vmem:[#allocation8 + $0x8] sm:$0xff]
    %v264 = vld [vmem:[#allocation8 + $0x10] sm:$0xff]
    %v265 = vld [vmem:[#allocation8 + $0x18] sm:$0xff]
    %v266 = vld [vmem:[#allocation8 + $0x20] sm:$0xff]
    %v267 = vld [vmem:[#allocation8 + $0x28] sm:$0xff]
    %v268 = vld [vmem:[#allocation8 + $0x30] sm:$0xff]
    %v269 = vld [vmem:[#allocation8 + $0x38] sm:$0xff]
    %v270 = vld [vmem:[%s6] sm:$0x3]
    %v272 = vlaneseq
    %v273 = vshrl.u32 %v272, 7
    %v274 = vsub.s32 0, %v273
    %v275 = vrot.slane %v270, %v274
    %v276 = vlaneseq
    %v277 = vshrl.u32 %v276, 7
    %v278 = vsub.s32 1, %v277
    %v279 = vrot.slane %v270, %v278
    %v283 = vsel %vm92, %v261, 0
    %285 = vmatprep.subr.mxu0 %v263
    %286 = vmatpush1.msra.mxu0 %v262
    %287 = vmatprep.subr.mxu0 %v265
    %288 = vmatpush1.msra.mxu0 %v264
    %289 = vmatprep.subr.mxu0 %v267
    %290 = vmatpush1.msra.mxu0 %v266
    %291 = vmatprep.subr.mxu0 %v269
    %292 = vmatpush1.msra.mxu0 %v268
    %293 = vmatprep.subr.mxu0 0.0
    %294 = vmatpush1.msra.mxu0 0.0
    %295 = vmatprep.subr.mxu0 0.0
    %296 = vmatpush1.msra.mxu0 0.0
    %297 = vmatprep.subr.mxu0 0.0
    %298 = vmatpush1.msra.mxu0 0.0
    %299 = vmatprep.subr.mxu0 0.0
    %300 = vmatpush1.msra.mxu0 0.0
    %301 = vmatprep.subr.mxu0 0.0
    %302 = vmatpush1.msra.mxu0 0.0
    %303 = vmatprep.subr.mxu0 0.0
    %304 = vmatpush1.msra.mxu0 0.0
    %305 = vmatprep.subr.mxu0 0.0
    %306 = vmatpush1.msra.mxu0 0.0
    %307 = vmatprep.subr.mxu0 0.0
    %308 = vmatpush1.msra.mxu0 0.0
    %309 = vmatprep.subr.mxu0 0.0
    %310 = vmatpush1.msra.mxu0 0.0
    %311 = vmatprep.subr.mxu0 0.0
    %312 = vmatpush1.msra.mxu0 0.0
    %313 = vmatprep.subr.mxu0 0.0
    %314 = vmatpush1.msra.mxu0 0.0
    %315 = vmatprep.subr.mxu0 0.0
    %316 = vmatpush1.msra.mxu0 0.0
    %317 = vmatprep.subr.mxu0 0.0
    %318 = vmatpush1.msra.mxu0 0.0
    %319 = vmatprep.subr.mxu0 0.0
    %320 = vmatpush1.msra.mxu0 0.0
    %321 = vmatprep.subr.mxu0 0.0
    %322 = vmatpush1.msra.mxu0 0.0
    %323 = vmatprep.subr.mxu0 0.0
    %324 = vmatpush1.msra.mxu0 0.0
    %325 = vmatprep.subr.mxu0 0.0
    %326 = vmatpush1.msra.mxu0 0.0
    %327 = vmatprep.subr.mxu0 0.0
    %328 = vmatpush1.msra.mxu0 0.0
    %329 = vmatprep.subr.mxu0 0.0
    %330 = vmatpush1.msra.mxu0 0.0
    %331 = vmatprep.subr.mxu0 0.0
    %332 = vmatpush1.msra.mxu0 0.0
    %333 = vmatprep.subr.mxu0 0.0
    %334 = vmatpush1.msra.mxu0 0.0
    %335 = vmatprep.subr.mxu0 0.0
    %336 = vmatpush1.msra.mxu0 0.0
    %337 = vmatprep.subr.mxu0 0.0
    %338 = vmatpush1.msra.mxu0 0.0
    %339 = vmatprep.subr.mxu0 0.0
    %340 = vmatpush1.msra.mxu0 0.0
    %341 = vmatprep.subr.mxu0 0.0
    %342 = vmatpush1.msra.mxu0 0.0
    %343 = vmatprep.subr.mxu0 0.0
    %344 = vmatpush1.msra.mxu0 0.0
    %345 = vmatprep.subr.mxu0 0.0
    %346 = vmatpush1.msra.mxu0 0.0
    %347 = vmatprep.subr.mxu0 0.0
    %348 = vmatpush1.msra.mxu0 0.0
    %349 = vmatprep.mubr.f32.mxu0 0.0
    %350 = vmatmul.mubr.f32.gmra.mrb[0].mxu0 %v283
    %v351 = vpop.f32.mrb[0].mxu0
    %v352 = vadd.f32 %v275, %v351
    %v353 = vpop.f32.mrb[0].mxu0
    %v354 = vadd.f32 %v279, %v353
    %355 = vdwg.mxu0
    %v356 = vmul.f32 %v352, 0.2
    %v357 = vtanh.pop %v356
    %v358 = vmul.f32 %v357, 5.0
    %v359 = vadd.f32 %v354, 4.9932394
    %v360 = vmax.f32 %v359, 0.0
    %v361 = vand.u32 2147483647, %v359
    %v362 = vsub.f32 0.0, %v361
    %v363 = vmul.f32 %v362, 1.442695
    %v364 = vpow.pop %v363
    %v365 = vadd.f32 %v364, 1.0
    %v366 = vlog2.pop %v365
    %v367 = vmul.f32 %v366, 0.6931472
    %v368 = vmul.f32 -0.5, %v364
    %v369 = vadd.f32 %v368, 1.0
    %v370 = vmul.f32 %v369, %v364
    %v371 = vand.u32 2147483647, %v364
    %vm372 = vcmp.lt.f32.partialorder %v371, 0.0004427343
    %v373 = vsel %vm372, %v370, %v367
    %v374 = vadd.f32 %v360, %v373
    %v375 = vadd.f32 %v374, 0.0001
    %376 = vst [vmem:[#allocation10] sm:$0xff] %v358
    %377 = vst [vmem:[#allocation10 + $0x8] sm:$0xff] %v375
    // Predicated region
    $region46: #{tpu_custom_call.1} parent=1 // pred_check
      _
    $region47: #{tpu_custom_call.1} parent=1 // pred_check_branch
      %379 = sbr.rel (0) target = $region49
    $region48: #{tpu_custom_call.1} parent=1 // pred_region
      %s381 = ssub.s32 256, 256
      %382 = vsyncadd [#allocation4], %s381
      %s384 = sshll.u32 [#allocation10], 4
      %s385 = int_to_ptr.vmem [resolvable:$true] %s384
      %387 = dma.vmem_to_hbm [thread:$0]  %s385, 256, %s7, [#allocation4]
    $region49: #{tpu_custom_call.1} parent=1 // pred_fallthru
      _
    // Predicated region
    $region50: #{tpu_custom_call.1} parent=1 // pred_check
      _
    $region51: #{tpu_custom_call.1} parent=1 // pred_check_branch
      %389 = sbr.rel (0) target = $region53
    $region52: #{tpu_custom_call.1} parent=1 // pred_region
      %390 = dma.done [#allocation4], 256
    $region53: #{tpu_custom_call.1} parent=1 // pred_fallthru
      _
    %391 = vsyncpa [#allocation3], 1
    %392 = vsyncpa [#allocation6], 1
    %393 = vsyncpa [#allocation9], 1
    %394 = vsyncpa [#allocation4], 1

</llo_original>
